<compile_context>
chip_gen: v7x
topology: tpu7x:2x2x1
jax: 0.10.0
libtpu: 0.0.40
codegen_flags: <defaults>
</compile_context>

<pallas_src>
import numpy as np

import jax
import jax.numpy as jnp
from jax.experimental import pallas as pl
from jax.experimental.pallas import tpu as pltpu


def _round_up(x: int, m: int) -> int:
    return ((x + m - 1) // m) * m


def _vmem_capacity_bytes() -> int:
    """Per-chip VMEM capacity, with a conservative (v7x) fallback."""
    try:
        info = pltpu.get_tpu_info()
        cap = getattr(info, "vmem_capacity_bytes", None)
        if cap:
            return int(cap)
    except Exception:
        pass
    return 64 << 20  # conservative: v7x per-TC VMEM


# ----------------------------------------------------------------------------
# Pallas kernel
# ----------------------------------------------------------------------------
def _make_encoder_kernel(num_layers: int, softplus_out: bool, latent_dim: int):
    """Kernel body for a given (static) number of dense layers."""

    def kernel(*refs):
        # refs layout:
        #   [x_tile,
        #    w0, b0, ..., w_{L-1}, b_{L-1},     (dense stack, Tanh)
        #    w_head, b_head,                    (fused fc11||fc12, 8-lane head)
        #    out_tile]
        x_ref = refs[0]
        cdt = x_ref.dtype                      # compute dtype (bf16 or f32)
        idx = 1

        h = x_ref[...]
        for _ in range(num_layers):
            w = refs[idx][...]
            b = refs[idx + 1][...]             # f32 bias
            idx += 2
            acc = jnp.dot(h, w, preferred_element_type=jnp.float32) + b
            h = jnp.tanh(acc).astype(cdt)      # activation math stays f32

        w_head = refs[idx][...]
        b_head = refs[idx + 1][...]            # f32 bias
        out_ref = refs[idx + 2]

        head = jnp.dot(h, w_head, preferred_element_type=jnp.float32) + b_head
        if softplus_out:
            # softplus only on the logstd lanes [latent, 2*latent)
            lane = jax.lax.broadcasted_iota(jnp.int32, head.shape, 1)
            is_ls = (lane >= latent_dim) & (lane < 2 * latent_dim)
            head = jnp.where(is_ls, jax.nn.softplus(head), head)

        out_ref[...] = head.astype(out_ref.dtype)

    return kernel


# ----------------------------------------------------------------------------
# Parameter construction (deterministic, mimics torch.nn.Linear default init)
# ----------------------------------------------------------------------------
def init_fc_encoder_params(key, in_dim, latent_dim=2, num_layers=2, hidden_dim=32):
    input_flat = int(np.prod(in_dim))

    def linear(key, fan_in, fan_out):
        kw, kb = jax.random.split(key)
        bound = 1.0 / np.sqrt(fan_in)
        w = jax.random.uniform(kw, (fan_in, fan_out), jnp.float32, -bound, bound)
        b = jax.random.uniform(kb, (1, fan_out), jnp.float32, -bound, bound)
        return w, b

    params = {"dense": [], "fc11": None, "fc12": None}
    keys = jax.random.split(key, num_layers + 2)
    for i in range(num_layers):
        fan_in = input_flat if i == 0 else hidden_dim
        params["dense"].append(linear(keys[i], fan_in, hidden_dim))
    params["fc11"] = linear(keys[num_layers], hidden_dim, latent_dim)
    params["fc12"] = linear(keys[num_layers + 1], hidden_dim, latent_dim)
    return params


# ----------------------------------------------------------------------------
# One-time parameter prep: pad hidden to 128 lanes, fuse + slim the head,
# cast weights to the compute dtype.  Call once, reuse across forwards.
# ----------------------------------------------------------------------------
def pack_fc_encoder_params(params, latent_dim=2, compute_dtype=jnp.bfloat16):
    num_layers = len(params["dense"])
    hidden_dim = params["dense"][0][0].shape[1]
    input_flat = params["dense"][0][0].shape[0]
    hidden_pad = _round_up(hidden_dim, 128)
    head_cols = 2 * latent_dim
    head_pad = _round_up(max(head_cols, 1), 8)   # slim output: 8 lanes, not 128

    dense = []
    for i, (w, b) in enumerate(params["dense"]):
        fan_in = w.shape[0]
        in_pad = input_flat if i == 0 else hidden_pad
        wp = jnp.zeros((in_pad, hidden_pad), jnp.float32)
        wp = wp.at[:fan_in, :hidden_dim].set(w)
        bp = jnp.zeros((1, hidden_pad), jnp.float32)
        bp = bp.at[:, :hidden_dim].set(b.reshape(1, -1))
        dense.append((wp.astype(compute_dtype), bp))   # bias stays f32

    w_mu, b_mu = params["fc11"]
    w_ls, b_ls = params["fc12"]
    w_head = jnp.zeros((hidden_pad, head_pad), jnp.float32)
    w_head = w_head.at[:hidden_dim, :latent_dim].set(w_mu)
    w_head = w_head.at[:hidden_dim, latent_dim:head_cols].set(w_ls)
    b_head = jnp.zeros((1, head_pad), jnp.float32)
    b_head = b_head.at[:, :latent_dim].set(b_mu.reshape(1, -1))
    b_head = b_head.at[:, latent_dim:head_cols].set(b_ls.reshape(1, -1))

    return {
        "dense": dense,
        "w_head": w_head.astype(compute_dtype),
        "b_head": b_head,
        "latent_dim": latent_dim,
        "num_layers": num_layers,
        "head_pad": head_pad,
        "input_flat": input_flat,
        "compute_dtype": compute_dtype,
    }


# ----------------------------------------------------------------------------
# Wrapper: flatten + batch-tiled pallas_call with resident weights
# ----------------------------------------------------------------------------
def fc_encoder_forward(x, packed, softplus_out=False, batch_tile=None):
    cdt = packed["compute_dtype"]
    latent_dim = packed["latent_dim"]
    num_layers = packed["num_layers"]
    head_pad = packed["head_pad"]
    input_flat = packed["input_flat"]

    batch = x.shape[0]
    x_flat = x.reshape(batch, -1).astype(cdt)
    assert x_flat.shape[1] == input_flat, "input feature size mismatch"

    # --- per-chip VMEM-driven tile sizing ------------------------------------
    in_bytes = np.dtype(cdt).itemsize
    weight_bytes = 0
    for (w, b) in packed["dense"]:
        weight_bytes += w.size * w.dtype.itemsize + b.size * 4
    weight_bytes += (packed["w_head"].size * packed["w_head"].dtype.itemsize
                     + packed["b_head"].size * 4)

    vmem_cap = _vmem_capacity_bytes()
    vmem_limit = min(int(0.75 * vmem_cap), 96 << 20)     # ~48 MiB on v7x, 96 MiB v5e/v6e
    per_row = 2 * (input_flat * in_bytes + head_pad * 4)  # double-buffered x + out
    budget = int(0.6 * vmem_limit) - 2 * weight_bytes     # weights (double-buffered)
    tb_cap = max(8, (budget // per_row) // 8 * 8)
    tb_cap = min(tb_cap, 4096)
    if batch_tile is not None:
        tb_cap = min(tb_cap, max(8, _round_up(batch_tile, 8)))

    # >= 2 grid steps so v7x's two TensorCores both get work; balance tile size
    # to the batch so zero-row padding waste is minimal.
    ntiles = max(2, pl.cdiv(batch, tb_cap))
    tb = _round_up(pl.cdiv(batch, ntiles), 8)
    padded_batch = tb * ntiles
    if padded_batch != batch:
        x_flat = jnp.pad(x_flat, ((0, padded_batch - batch), (0, 0)))
    grid = (ntiles,)

    # --- operands + BlockSpecs -----------------------------------------------
    operands = [x_flat]
    in_specs = [pl.BlockSpec((tb, input_flat), lambda i: (i, 0))]
    for (w, b) in packed["dense"]:
        operands.append(w)
        in_specs.append(pl.BlockSpec(w.shape, lambda i: (0, 0)))   # VMEM-resident
        operands.append(b)
        in_specs.append(pl.BlockSpec(b.shape, lambda i: (0, 0)))
    operands.append(packed["w_head"])
    in_specs.append(pl.BlockSpec(packed["w_head"].shape, lambda i: (0, 0)))
    operands.append(packed["b_head"])
    in_specs.append(pl.BlockSpec(packed["b_head"].shape, lambda i: (0, 0)))

    kernel = _make_encoder_kernel(num_layers, softplus_out, latent_dim)

    out = pl.pallas_call(
        kernel,
        out_shape=jax.ShapeDtypeStruct((padded_batch, head_pad), jnp.float32),
        grid=grid,
        in_specs=in_specs,
        out_specs=pl.BlockSpec((tb, head_pad), lambda i: (i, 0)),
        compiler_params=pltpu.CompilerParams(
            dimension_semantics=("parallel",),
            vmem_limit_bytes=vmem_limit,
        ),
    )(*operands)

    z_mu = out[:batch, :latent_dim]
    z_logstd = out[:batch, latent_dim:2 * latent_dim]
    return z_mu, z_logstd


# Pure-JAX reference for correctness checks (uses the original, unpacked params).
def fc_encoder_reference(x, params, softplus_out=False):
    h = x.reshape(x.shape[0], -1).astype(jnp.float32)
    for (w, b) in params["dense"]:
        h = jnp.tanh(h @ w + b)
    z_mu = h @ params["fc11"][0] + params["fc11"][1]
    z_ls = h @ params["fc12"][0] + params["fc12"][1]
    if softplus_out:
        z_ls = jax.nn.softplus(z_ls)
    return z_mu, z_ls


# ----------------------------------------------------------------------------
if __name__ == "__main__":
    key = jax.random.PRNGKey(0)
    k_param, k_x, k_x2 = jax.random.split(key, 3)

    # Module defaults: latent_dim=2, num_layers=2, hidden_dim=32.
    in_dim = (16, 16)
    latent_dim, num_layers, hidden_dim = 2, 2, 32

    params = init_fc_encoder_params(
        k_param, in_dim, latent_dim=latent_dim,
        num_layers=num_layers, hidden_dim=hidden_dim)

    # One-time parameter prep (hoisted out of the forward pass).
    packed_f32 = pack_fc_encoder_params(params, latent_dim, jnp.float32)
    packed_bf16 = pack_fc_encoder_params(params, latent_dim, jnp.bfloat16)  # default path

    # ---- check 1: small batch, softplus_out=False (module default), f32 ----
    batch = 2
    x = jax.random.normal(k_x, (batch,) + in_dim, dtype=jnp.float32)
    z_mu, z_logstd = fc_encoder_forward(x, packed_f32, softplus_out=False)
    jax.block_until_ready((z_mu, z_logstd))
    ref_mu, ref_ls = fc_encoder_reference(x, params, softplus_out=False)
    np.testing.assert_allclose(np.asarray(z_mu), np.asarray(ref_mu),
                               rtol=1e-3, atol=1e-3)
    np.testing.assert_allclose(np.asarray(z_logstd), np.asarray(ref_ls),
                               rtol=1e-3, atol=1e-3)
    assert z_mu.shape == (batch, latent_dim)
    assert z_logstd.shape == (batch, latent_dim)

    # ---- check 2: multi-tile grid with remainder + softplus_out=True, f32 ----
    batch2 = 300
    x2 = jax.random.normal(k_x2, (batch2,) + in_dim, dtype=jnp.float32)
    z_mu2, z_ls2 = fc_encoder_forward(
        x2, packed_f32, softplus_out=True, batch_tile=128)
    jax.block_until_ready((z_mu2, z_ls2))
    ref_mu2, ref_ls2 = fc_encoder_reference(x2, params, softplus_out=True)
    np.testing.assert_allclose(np.asarray(z_mu2), np.asarray(ref_mu2),
                               rtol=1e-3, atol=1e-3)
    np.testing.assert_allclose(np.asarray(z_ls2), np.asarray(ref_ls2),
                               rtol=1e-3, atol=1e-3)
    assert z_mu2.shape == (batch2, latent_dim)
    assert z_ls2.shape == (batch2, latent_dim)

    # ---- check 3: default bf16 compute path (halved HBM read traffic) ----
    z_mu3, z_ls3 = fc_encoder_forward(x2, packed_bf16, softplus_out=False)
    jax.block_until_ready((z_mu3, z_ls3))
    ref_mu3, ref_ls3 = fc_encoder_reference(x2, params, softplus_out=False)
    assert np.all(np.isfinite(np.asarray(z_mu3)))
    np.testing.assert_allclose(np.asarray(z_mu3), np.asarray(ref_mu3),
                               rtol=0.1, atol=0.1)
    np.testing.assert_allclose(np.asarray(z_ls3), np.asarray(ref_ls3),
                               rtol=0.1, atol=0.1)

    print("KERNEL_OK")
</pallas_src>

<mosaic_0001>
module attributes {stable_mosaic.version = 11 : i64} {
  func.func @kernel(%arg0: i32, %arg1: memref<8x256xf32, #tpu.memory_space<vmem>>, %arg2: memref<256x128xf32, #tpu.memory_space<vmem>>, %arg3: memref<1x128xf32, #tpu.memory_space<vmem>>, %arg4: memref<128x128xf32, #tpu.memory_space<vmem>>, %arg5: memref<1x128xf32, #tpu.memory_space<vmem>>, %arg6: memref<128x8xf32, #tpu.memory_space<vmem>>, %arg7: memref<1x8xf32, #tpu.memory_space<vmem>>, %arg8: memref<8x8xf32, #tpu.memory_space<vmem>>) attributes {dimension_semantics = [#tpu.dimension_semantics<parallel>], iteration_bounds = array<i64: 2>, scalar_prefetch = 0 : i64, scratch_operands = 0 : i64, tpu.core_type = #tpu.core_type<tc>, window_params = [{transform_indices = @transform_0, window_bounds = array<i64: 8, 256>}, {pipeline_mode = #tpu.pipeline_mode<synchronous>, transform_indices = @transform_1, window_bounds = array<i64: 256, 128>}, {pipeline_mode = #tpu.pipeline_mode<synchronous>, transform_indices = @transform_2, window_bounds = array<i64: 1, 128>}, {pipeline_mode = #tpu.pipeline_mode<synchronous>, transform_indices = @transform_3, window_bounds = array<i64: 128, 128>}, {pipeline_mode = #tpu.pipeline_mode<synchronous>, transform_indices = @transform_4, window_bounds = array<i64: 1, 128>}, {pipeline_mode = #tpu.pipeline_mode<synchronous>, transform_indices = @transform_5, window_bounds = array<i64: 128, 8>}, {pipeline_mode = #tpu.pipeline_mode<synchronous>, transform_indices = @transform_6, window_bounds = array<i64: 1, 8>}, {transform_indices = @transform_7, window_bounds = array<i64: 8, 8>}]} {
    %c0 = arith.constant 0 : index
    %c0_0 = arith.constant 0 : index
    %0 = vector.load %arg1[%c0, %c0_0] : memref<8x256xf32, #tpu.memory_space<vmem>>, vector<8x256xf32>
    %c0_1 = arith.constant 0 : index
    %c0_2 = arith.constant 0 : index
    %1 = vector.load %arg2[%c0_1, %c0_2] : memref<256x128xf32, #tpu.memory_space<vmem>>, vector<256x128xf32>
    %c0_3 = arith.constant 0 : index
    %c0_4 = arith.constant 0 : index
    %2 = vector.load %arg3[%c0_3, %c0_4] : memref<1x128xf32, #tpu.memory_space<vmem>>, vector<1x128xf32>
    %cst = arith.constant dense<0.000000e+00> : vector<8x128xf32>
    %3 = tpu.matmul %0, %1, %cst {dimension_numbers = #tpu.dot_dimension_numbers<[1], [0], [0], [1], [0, 0, 1, 1], [], []>} : vector<8x256xf32>, vector<256x128xf32>, vector<8x128xf32> -> vector<8x128xf32>
    %4 = vector.broadcast %2 : vector<1x128xf32> to vector<8x128xf32>
    %5 = arith.addf %3, %4 : vector<8x128xf32>
    %6 = math.tanh %5 : vector<8x128xf32>
    %c0_5 = arith.constant 0 : index
    %c0_6 = arith.constant 0 : index
    %7 = vector.load %arg4[%c0_5, %c0_6] : memref<128x128xf32, #tpu.memory_space<vmem>>, vector<128x128xf32>
    %c0_7 = arith.constant 0 : index
    %c0_8 = arith.constant 0 : index
    %8 = vector.load %arg5[%c0_7, %c0_8] : memref<1x128xf32, #tpu.memory_space<vmem>>, vector<1x128xf32>
    %cst_9 = arith.constant dense<0.000000e+00> : vector<8x128xf32>
    %9 = tpu.matmul %6, %7, %cst_9 {dimension_numbers = #tpu.dot_dimension_numbers<[1], [0], [0], [1], [0, 0, 1, 1], [], []>} : vector<8x128xf32>, vector<128x128xf32>, vector<8x128xf32> -> vector<8x128xf32>
    %10 = vector.broadcast %8 : vector<1x128xf32> to vector<8x128xf32>
    %11 = arith.addf %9, %10 : vector<8x128xf32>
    %12 = math.tanh %11 : vector<8x128xf32>
    %c0_10 = arith.constant 0 : index
    %c0_11 = arith.constant 0 : index
    %13 = vector.load %arg6[%c0_10, %c0_11] : memref<128x8xf32, #tpu.memory_space<vmem>>, vector<128x8xf32>
    %c0_12 = arith.constant 0 : index
    %c0_13 = arith.constant 0 : index
    %14 = vector.load %arg7[%c0_12, %c0_13] : memref<1x8xf32, #tpu.memory_space<vmem>>, vector<1x8xf32>
    %cst_14 = arith.constant dense<0.000000e+00> : vector<8x8xf32>
    %15 = tpu.matmul %12, %13, %cst_14 {dimension_numbers = #tpu.dot_dimension_numbers<[1], [0], [0], [1], [0, 0, 1, 1], [], []>} : vector<8x128xf32>, vector<128x8xf32>, vector<8x8xf32> -> vector<8x8xf32>
    %16 = vector.broadcast %14 : vector<1x8xf32> to vector<8x8xf32>
    %17 = arith.addf %15, %16 : vector<8x8xf32>
    %c0_15 = arith.constant 0 : index
    %c0_16 = arith.constant 0 : index
    %18 = vector.load %arg8[%c0_15, %c0_16] : memref<8x8xf32, #tpu.memory_space<vmem>>, vector<8x8xf32>
    tpu.vector_store %arg8[%c0_15, %c0_16], %17 {strides = array<i32>} : memref<8x8xf32, #tpu.memory_space<vmem>>, vector<8x8xf32>,
    return
  }
  func.func @transform_0(%arg0: i32) -> (i32, i32) {
    %c0_i32 = arith.constant 0 : i32
    %c0_i32_0 = arith.constant 0 : i32
    return %arg0, %c0_i32 : i32, i32
  }
  func.func @transform_1(%arg0: i32) -> (i32, i32) {
    %c0_i32 = arith.constant 0 : i32
    %c0_i32_0 = arith.constant 0 : i32
    %c0_i32_1 = arith.constant 0 : i32
    return %c0_i32, %c0_i32_0 : i32, i32
  }
  func.func @transform_2(%arg0: i32) -> (i32, i32) {
    %c0_i32 = arith.constant 0 : i32
    %c0_i32_0 = arith.constant 0 : i32
    %c0_i32_1 = arith.constant 0 : i32
    return %c0_i32, %c0_i32_0 : i32, i32
  }
  func.func @transform_3(%arg0: i32) -> (i32, i32) {
    %c0_i32 = arith.constant 0 : i32
    %c0_i32_0 = arith.constant 0 : i32
    %c0_i32_1 = arith.constant 0 : i32
    return %c0_i32, %c0_i32_0 : i32, i32
  }
  func.func @transform_4(%arg0: i32) -> (i32, i32) {
    %c0_i32 = arith.constant 0 : i32
    %c0_i32_0 = arith.constant 0 : i32
    %c0_i32_1 = arith.constant 0 : i32
    return %c0_i32, %c0_i32_0 : i32, i32
  }
  func.func @transform_5(%arg0: i32) -> (i32, i32) {
    %c0_i32 = arith.constant 0 : i32
    %c0_i32_0 = arith.constant 0 : i32
    %c0_i32_1 = arith.constant 0 : i32
    return %c0_i32, %c0_i32_0 : i32, i32
  }
  func.func @transform_6(%arg0: i32) -> (i32, i32) {
    %c0_i32 = arith.constant 0 : i32
    %c0_i32_0 = arith.constant 0 : i32
    %c0_i32_1 = arith.constant 0 : i32
    return %c0_i32, %c0_i32_0 : i32, i32
  }
  func.func @transform_7(%arg0: i32) -> (i32, i32) {
    %c0_i32 = arith.constant 0 : i32
    %c0_i32_0 = arith.constant 0 : i32
    return %arg0, %c0_i32 : i32, i32
  }
}

</mosaic_0001>

<llo_original>
// kernel: tpu_custom_call.1
$region0: #{tpu_custom_call.1}
  #allocation0 [shape = 'u32[]', space=smem, size = 0x4, offset = 0x4, fixed_abs, tag = 'smem constant byte address 0x4 - core index']
  #allocation1 [shape = 'u32[144,128]{1,0:T(1,128)}', space=vmem, size = 0x12000, scoped, tag = 'internal scratch']
  %s0 = inlined_call_operand.hbm [shape: f32[16,256], index: 0, kind: input, shape index: {}]
  %s1 = inlined_call_operand.hbm [shape: f32[256,128], index: 1, kind: input, shape index: {}]
  %s2 = inlined_call_operand.vmem [shape: f32[1,128], index: 2, kind: input, shape index: {}]
  %s3 = inlined_call_operand.vmem [shape: f32[128,128], index: 3, kind: input, shape index: {}]
  %s4 = inlined_call_operand.vmem [shape: f32[1,128], index: 4, kind: input, shape index: {}]
  %s5 = inlined_call_operand.vmem [shape: f32[128,8], index: 5, kind: input, shape index: {}]
  %s6 = inlined_call_operand.vmem [shape: f32[1,8], index: 6, kind: input, shape index: {}]
  %s7 = inlined_call_operand.vmem [shape: f32[16,8], index: 7, kind: output, shape index: {}]
  %s8 = sld [smem:[#allocation0]]
  $region69: #{tpu_custom_call.1} parent=0
    _
  %s10 = ssub.s32 1, %s8
  %s11 = scalar_select 0, %s10, %s8
  $region1: #{tpu_custom_call.1} parent=0
    #allocation2 [shape = 'u8[16384]{0}', space=vmem, size = 0x4000, scoped, tag = 'input window, operand 0']
    #allocation3 [shape = 's32[2]{0}', space=sflag, size = 0x8, scoped, tag = 'scoped memory for tpu_custom_call.1']
    #allocation4 [shape = 'u8[131072]{0}', space=vmem, size = 0x20000, scoped, tag = 'input window, operand 1, single buffered']
    #allocation5 [shape = 's32[1]{0}', space=sflag, size = 0x4, scoped, tag = 'scoped memory for tpu_custom_call.1']
    %12 = vsyncpa [#allocation3], 0
    %s13 = scalar_lea.sflag [#allocation3], 1
    %14 = vsyncpa %s13, 0
    %15 = vsyncpa [#allocation5], 0
    loop: start=0, step=1, limit=4
    $region2: #{tpu_custom_call.1} parent=1 // loop_pre_header
      _
    $region3: #{tpu_custom_call.1} parent=1 // loop_header
      %s17 = sphi 0, %s21
      %p18 = scmp.ge.s32.totalorder %s17, 4
      %s27 = sphi 0, %s29
      %s30 = sphi 0, %s27
      %s31 = sphi 0, %s30
      %s47 = sphi 0, %s31
      %s51 = sphi 0, %s51
      %s53 = sphi 0, %s51
      %s54 = sphi 0, %s53
      %s68 = sphi 0, %s54
      %s72 = sphi 0, %s72
      %s74 = sphi 0, %s72
      %s75 = sphi 0, %s74
      %s89 = sphi 0, %s75
      %s93 = sphi 0, %s93
      %s95 = sphi 0, %s93
      %s96 = sphi 0, %s95
      %s110 = sphi 0, %s96
      %s114 = sphi 0, %s114
      %s116 = sphi 0, %s114
      %s117 = sphi 0, %s116
      %s131 = sphi 0, %s117
      %s135 = sphi 0, %s135
      %s137 = sphi 0, %s135
      %s138 = sphi 0, %s137
      %s152 = sphi 0, %s138
      %s156 = sphi 0, %s156
      %s158 = sphi 0, %s156
      %s159 = sphi 0, %s158
      %s173 = sphi 0, %s159
      %s179 = sphi 0, %s181
      %s182 = sphi 0, %s179
      %s183 = sphi 0, %s182
      %s199 = sphi 0, %s183
    $region4: #{tpu_custom_call.1} parent=1 // loop_header_branch
      %20 = sbr.rel (%p18) target = $region8
    $region5: #{tpu_custom_call.1} parent=1 // loop_body
      %s22 = ssub.s32 %s17, 1
      %s23 = ssub.s32 %s17, 2
      %s24 = sadd.s32 %s17, 1
      %s25 = ssub.s32 %s17, %s24
      %p26 = scmp.eq.s32.totalorder %s25, 0
      %s28 = sadd.s32 %s27, 1
      %s29 = scalar_select %p26, %s27, %s28
      %p32 = pneg %p26
      %p33 = scmp.eq.s32.totalorder %s17, 1
      %p34 = por %p32, %p33
      %p35 = scmp.ne.s32.totalorder %s27, %s30
      %p36 = scmp.eq.s32.totalorder %s17, 0
      %p37 = por %p35, %p36
      %p38 = scmp.ne.s32.totalorder %s27, %s30
      %p39 = scmp.eq.s32.totalorder %s22, 1
      %p40 = por %p38, %p39
      %p41 = scmp.ne.s32.totalorder %s30, %s31
      %p42 = scmp.eq.s32.totalorder %s22, 0
      %p43 = por %p41, %p42
      %p44 = scmp.ne.s32.totalorder %s30, %s31
      %p45 = scmp.eq.s32.totalorder %s23, 1
      %p46 = por %p44, %p45
      %p48 = scmp.ne.s32.totalorder %s31, %s47
      %p49 = scmp.eq.s32.totalorder %s23, 0
      %p50 = por %p48, %p49
      %s52 = sadd.s32 %s51, 1
      %p55 = scmp.eq.s32.totalorder %s17, 1
      %p56 = scmp.ne.s32.totalorder %s51, %s53
      %p57 = scmp.eq.s32.totalorder %s17, 0
      %p58 = por %p56, %p57
      %p59 = scmp.ne.s32.totalorder %s51, %s53
      %p60 = scmp.eq.s32.totalorder %s22, 1
      %p61 = por %p59, %p60
      %p62 = scmp.ne.s32.totalorder %s53, %s54
      %p63 = scmp.eq.s32.totalorder %s22, 0
      %p64 = por %p62, %p63
      %p65 = scmp.ne.s32.totalorder %s53, %s54
      %p66 = scmp.eq.s32.totalorder %s23, 1
      %p67 = por %p65, %p66
      %p69 = scmp.ne.s32.totalorder %s54, %s68
      %p70 = scmp.eq.s32.totalorder %s23, 0
      %p71 = por %p69, %p70
      %s73 = sadd.s32 %s72, 1
      %p76 = scmp.eq.s32.totalorder %s17, 1
      %p77 = scmp.ne.s32.totalorder %s72, %s74
      %p78 = scmp.eq.s32.totalorder %s17, 0
      %p79 = por %p77, %p78
      %p80 = scmp.ne.s32.totalorder %s72, %s74
      %p81 = scmp.eq.s32.totalorder %s22, 1
      %p82 = por %p80, %p81
      %p83 = scmp.ne.s32.totalorder %s74, %s75
      %p84 = scmp.eq.s32.totalorder %s22, 0
      %p85 = por %p83, %p84
      %p86 = scmp.ne.s32.totalorder %s74, %s75
      %p87 = scmp.eq.s32.totalorder %s23, 1
      %p88 = por %p86, %p87
      %p90 = scmp.ne.s32.totalorder %s75, %s89
      %p91 = scmp.eq.s32.totalorder %s23, 0
      %p92 = por %p90, %p91
      %s94 = sadd.s32 %s93, 1
      %p97 = scmp.eq.s32.totalorder %s17, 1
      %p98 = scmp.ne.s32.totalorder %s93, %s95
      %p99 = scmp.eq.s32.totalorder %s17, 0
      %p100 = por %p98, %p99
      %p101 = scmp.ne.s32.totalorder %s93, %s95
      %p102 = scmp.eq.s32.totalorder %s22, 1
      %p103 = por %p101, %p102
      %p104 = scmp.ne.s32.totalorder %s95, %s96
      %p105 = scmp.eq.s32.totalorder %s22, 0
      %p106 = por %p104, %p105
      %p107 = scmp.ne.s32.totalorder %s95, %s96
      %p108 = scmp.eq.s32.totalorder %s23, 1
      %p109 = por %p107, %p108
      %p111 = scmp.ne.s32.totalorder %s96, %s110
      %p112 = scmp.eq.s32.totalorder %s23, 0
      %p113 = por %p111, %p112
      %s115 = sadd.s32 %s114, 1
      %p118 = scmp.eq.s32.totalorder %s17, 1
      %p119 = scmp.ne.s32.totalorder %s114, %s116
      %p120 = scmp.eq.s32.totalorder %s17, 0
      %p121 = por %p119, %p120
      %p122 = scmp.ne.s32.totalorder %s114, %s116
      %p123 = scmp.eq.s32.totalorder %s22, 1
      %p124 = por %p122, %p123
      %p125 = scmp.ne.s32.totalorder %s116, %s117
      %p126 = scmp.eq.s32.totalorder %s22, 0
      %p127 = por %p125, %p126
      %p128 = scmp.ne.s32.totalorder %s116, %s117
      %p129 = scmp.eq.s32.totalorder %s23, 1
      %p130 = por %p128, %p129
      %p132 = scmp.ne.s32.totalorder %s117, %s131
      %p133 = scmp.eq.s32.totalorder %s23, 0
      %p134 = por %p132, %p133
      %s136 = sadd.s32 %s135, 1
      %p139 = scmp.eq.s32.totalorder %s17, 1
      %p140 = scmp.ne.s32.totalorder %s135, %s137
      %p141 = scmp.eq.s32.totalorder %s17, 0
      %p142 = por %p140, %p141
      %p143 = scmp.ne.s32.totalorder %s135, %s137
      %p144 = scmp.eq.s32.totalorder %s22, 1
      %p145 = por %p143, %p144
      %p146 = scmp.ne.s32.totalorder %s137, %s138
      %p147 = scmp.eq.s32.totalorder %s22, 0
      %p148 = por %p146, %p147
      %p149 = scmp.ne.s32.totalorder %s137, %s138
      %p150 = scmp.eq.s32.totalorder %s23, 1
      %p151 = por %p149, %p150
      %p153 = scmp.ne.s32.totalorder %s138, %s152
      %p154 = scmp.eq.s32.totalorder %s23, 0
      %p155 = por %p153, %p154
      %s157 = sadd.s32 %s156, 1
      %p160 = scmp.eq.s32.totalorder %s17, 1
      %p161 = scmp.ne.s32.totalorder %s156, %s158
      %p162 = scmp.eq.s32.totalorder %s17, 0
      %p163 = por %p161, %p162
      %p164 = scmp.ne.s32.totalorder %s156, %s158
      %p165 = scmp.eq.s32.totalorder %s22, 1
      %p166 = por %p164, %p165
      %p167 = scmp.ne.s32.totalorder %s158, %s159
      %p168 = scmp.eq.s32.totalorder %s22, 0
      %p169 = por %p167, %p168
      %p170 = scmp.ne.s32.totalorder %s158, %s159
      %p171 = scmp.eq.s32.totalorder %s23, 1
      %p172 = por %p170, %p171
      %p174 = scmp.ne.s32.totalorder %s159, %s173
      %p175 = scmp.eq.s32.totalorder %s23, 0
      %p176 = por %p174, %p175
      %s177 = ssub.s32 %s17, %s24
      %p178 = scmp.eq.s32.totalorder %s177, 0
      %s180 = sadd.s32 %s179, 1
      %s181 = scalar_select %p178, %s179, %s180
      %p184 = pneg %p178
      %p185 = scmp.eq.s32.totalorder %s17, 1
      %p186 = por %p184, %p185
      %p187 = scmp.ne.s32.totalorder %s179, %s182
      %p188 = scmp.eq.s32.totalorder %s17, 0
      %p189 = por %p187, %p188
      %p190 = scmp.ne.s32.totalorder %s179, %s182
      %p191 = scmp.eq.s32.totalorder %s22, 1
      %p192 = por %p190, %p191
      %p193 = scmp.ne.s32.totalorder %s182, %s183
      %p194 = scmp.eq.s32.totalorder %s22, 0
      %p195 = por %p193, %p194
      %p196 = scmp.ne.s32.totalorder %s182, %s183
      %p197 = scmp.eq.s32.totalorder %s23, 1
      %p198 = por %p196, %p197
      %p200 = scmp.ne.s32.totalorder %s183, %s199
      %p201 = scmp.eq.s32.totalorder %s23, 0
      %p202 = por %p200, %p201
      %p203 = scmp.le.s32.totalorder 1, %s17
      %p204 = scmp.lt.s32.totalorder %s17, 3
      %p205 = pnand %p203, %p204
      %p206 = pneg %p205
      // Predicated region
      $region9: #{tpu_custom_call.1} parent=5 // pred_check
        _
      $region10: #{tpu_custom_call.1} parent=5 // pred_check_branch
        %208 = sbr.rel (%p205) target = $region12
      $region11: #{tpu_custom_call.1} parent=5 // pred_region
        %s209 = ssub.s32 %s17, 1
        // Predicated region
        $region13: #{tpu_custom_call.1} parent=11 // pred_check
          %p210 = pneg %p64
        $region14: #{tpu_custom_call.1} parent=11 // pred_check_branch
          %212 = sbr.rel (%p210) target = $region16
        $region15: #{tpu_custom_call.1} parent=11 // pred_region
          %s214 = ssub.s32 4096, 4096
          %215 = vsyncadd [#allocation5], %s214
          %s216 = sshll.u32 [#allocation4], 4
          %s217 = int_to_ptr.vmem [resolvable:$true] %s216
          %222 = dma.hbm_to_vmem [thread:$0]  %s1, 4096, %s217, [#allocation5], 128, 128, 8
        $region16: #{tpu_custom_call.1} parent=11 // pred_fallthru
          _
        // Predicated region
        $region17: #{tpu_custom_call.1} parent=11 // pred_check
          %p223 = pneg %p85
        $region18: #{tpu_custom_call.1} parent=11 // pred_check_branch
          %225 = sbr.rel (%p223) target = $region20
        $region19: #{tpu_custom_call.1} parent=11 // pred_region
          _
        $region20: #{tpu_custom_call.1} parent=11 // pred_fallthru
          _
        // Predicated region
        $region21: #{tpu_custom_call.1} parent=11 // pred_check
          %p226 = pneg %p106
        $region22: #{tpu_custom_call.1} parent=11 // pred_check_branch
          %228 = sbr.rel (%p226) target = $region24
        $region23: #{tpu_custom_call.1} parent=11 // pred_region
          _
        $region24: #{tpu_custom_call.1} parent=11 // pred_fallthru
          _
        // Predicated region
        $region25: #{tpu_custom_call.1} parent=11 // pred_check
          %p229 = pneg %p127
        $region26: #{tpu_custom_call.1} parent=11 // pred_check_branch
          %231 = sbr.rel (%p229) target = $region28
        $region27: #{tpu_custom_call.1} parent=11 // pred_region
          _
        $region28: #{tpu_custom_call.1} parent=11 // pred_fallthru
          _
        // Predicated region
        $region29: #{tpu_custom_call.1} parent=11 // pred_check
          %p232 = pneg %p148
        $region30: #{tpu_custom_call.1} parent=11 // pred_check_branch
          %234 = sbr.rel (%p232) target = $region32
        $region31: #{tpu_custom_call.1} parent=11 // pred_region
          _
        $region32: #{tpu_custom_call.1} parent=11 // pred_fallthru
          _
        // Predicated region
        $region33: #{tpu_custom_call.1} parent=11 // pred_check
          %p235 = pneg %p169
        $region34: #{tpu_custom_call.1} parent=11 // pred_check_branch
          %237 = sbr.rel (%p235) target = $region36
        $region35: #{tpu_custom_call.1} parent=11 // pred_region
          _
        $region36: #{tpu_custom_call.1} parent=11 // pred_fallthru
          _
      $region12: #{tpu_custom_call.1} parent=5 // pred_fallthru
        _
      %p238 = scmp.lt.s32.totalorder %s17, 2
      // Predicated region
      $region37: #{tpu_custom_call.1} parent=5 // pred_check
        %p239 = pneg %p238
      $region38: #{tpu_custom_call.1} parent=5 // pred_check_branch
        %241 = sbr.rel (%p239) target = $region40
      $region39: #{tpu_custom_call.1} parent=5 // pred_region
        // Predicated region
        $region41: #{tpu_custom_call.1} parent=39 // pred_check
          %p242 = pneg %p37
        $region42: #{tpu_custom_call.1} parent=39 // pred_check_branch
          %244 = sbr.rel (%p242) target = $region44
        $region43: #{tpu_custom_call.1} parent=39 // pred_region
          %s245 = sand.u32 %s27, 1
          %s246 = scalar_lea.sflag [#allocation3], %s245
          %s247 = sand.u32 %s27, 1
          %s248 = smul.addr %s247, 16
          %s249 = scalar_lea.vmem [#allocation2], %s248
          %s251 = ssub.s32 256, 256
          %252 = vsyncadd %s246, %s251
          %s253 = smul.addr %s17, 2
          %s254 = smul.addr %s253, 128
          %s255 = scalar_lea.hbm %s0, %s254
          %s257 = sshll.u32 %s249, 4
          %s258 = int_to_ptr.vmem [resolvable:$true] %s257
          %260 = dma.hbm_to_vmem [thread:$0]  %s255, 256, %s258, %s246
        $region44: #{tpu_custom_call.1} parent=39 // pred_fallthru
          _
      $region40: #{tpu_custom_call.1} parent=5 // pred_fallthru
        _
      %p261 = scmp.le.s32.totalorder 1, %s17
      %p262 = scmp.lt.s32.totalorder %s17, 3
      %p263 = pnand %p261, %p262
      %p264 = pneg %p263
      // Predicated region
      $region45: #{tpu_custom_call.1} parent=5 // pred_check
        _
      $region46: #{tpu_custom_call.1} parent=5 // pred_check_branch
        %266 = sbr.rel (%p263) target = $region48
      $region47: #{tpu_custom_call.1} parent=5 // pred_region
        %s267 = ssub.s32 %s17, 1
        %s268 = sand.u32 %s30, 1
        %s269 = scalar_lea.sflag [#allocation3], %s268
        %s270 = sand.u32 %s30, 1
        %s271 = smul.addr %s270, 16
        %s272 = scalar_lea.vmem [#allocation2], %s271
        // Predicated region
        $region49: #{tpu_custom_call.1} parent=47 // pred_check
          %p273 = pneg %p43
        $region50: #{tpu_custom_call.1} parent=47 // pred_check_branch
          %275 = sbr.rel (%p273) target = $region52
        $region51: #{tpu_custom_call.1} parent=47 // pred_region
          %276 = dma.done %s269, 256
        $region52: #{tpu_custom_call.1} parent=47 // pred_fallthru
          _
        // Predicated region
        $region53: #{tpu_custom_call.1} parent=47 // pred_check
          %p277 = pneg %p64
        $region54: #{tpu_custom_call.1} parent=47 // pred_check_branch
          %279 = sbr.rel (%p277) target = $region56
        $region55: #{tpu_custom_call.1} parent=47 // pred_region
          %280 = dma.done [#allocation5], 4096
        $region56: #{tpu_custom_call.1} parent=47 // pred_fallthru
          _
        %s281 = sand.u32 %s30, 1
        %s282 = scalar_lea.sflag [#allocation3], %s281
        %s283 = sand.u32 %s30, 1
        %s284 = smul.addr %s283, 16
        %s285 = scalar_lea.vmem [#allocation2], %s284
        %p286 = pneg %p43
        %p287 = pneg %p40
        %p288 = pneg %p64
        %p289 = pneg %p61
        %p290 = pneg %p85
        %p291 = pneg %p82
        %p292 = pneg %p106
        %p293 = pneg %p103
        %p294 = pneg %p127
        %p295 = pneg %p124
        %p296 = pneg %p148
        %p297 = pneg %p145
        %p298 = pneg %p169
        %p299 = pneg %p166
        %p300 = pneg %p195
        %p301 = pneg %p192
        %p302 = scmp.lt.s32.totalorder %s22, 1
        %s303 = scalar_select %p302, %s22, 1
        %s304 = smul.addr %s303, 8
        %s305 = scalar_lea.vmem %s7, %s304
        %p306 = scmp.lt.s32.totalorder %s22, 1
        %s307 = scalar_select %p306, %s22, 1
        %s308 = smul.addr %s307, 8
        %s309 = scalar_lea.vmem %s7, %s308
        %v310 = vld [vmem:[%s272] sm:$0xff]
        %v311 = vld [vmem:[%s272 + $0x8] sm:$0xff]
        %v312 = vld [vmem:[#allocation4] sm:$0xff]
        %v313 = vld [vmem:[#allocation4 + $0x8] sm:$0xff]
        %v314 = vld [vmem:[#allocation4 + $0x10] sm:$0xff]
        %v315 = vld [vmem:[#allocation4 + $0x18] sm:$0xff]
        %v316 = vld [vmem:[#allocation4 + $0x20] sm:$0xff]
        %v317 = vld [vmem:[#allocation4 + $0x28] sm:$0xff]
        %v318 = vld [vmem:[#allocation4 + $0x30] sm:$0xff]
        %v319 = vld [vmem:[#allocation4 + $0x38] sm:$0xff]
        %v320 = vld [vmem:[#allocation4 + $0x40] sm:$0xff]
        %v321 = vld [vmem:[#allocation4 + $0x48] sm:$0xff]
        %v322 = vld [vmem:[#allocation4 + $0x50] sm:$0xff]
        %v323 = vld [vmem:[#allocation4 + $0x58] sm:$0xff]
        %v324 = vld [vmem:[#allocation4 + $0x60] sm:$0xff]
        %v325 = vld [vmem:[#allocation4 + $0x68] sm:$0xff]
        %v326 = vld [vmem:[#allocation4 + $0x70] sm:$0xff]
        %v327 = vld [vmem:[#allocation4 + $0x78] sm:$0xff]
        %v328 = vld [vmem:[#allocation4 + $0x80] sm:$0xff]
        %v329 = vld [vmem:[#allocation4 + $0x88] sm:$0xff]
        %v330 = vld [vmem:[#allocation4 + $0x90] sm:$0xff]
        %v331 = vld [vmem:[#allocation4 + $0x98] sm:$0xff]
        %v332 = vld [vmem:[#allocation4 + $0xa0] sm:$0xff]
        %v333 = vld [vmem:[#allocation4 + $0xa8] sm:$0xff]
        %v334 = vld [vmem:[#allocation4 + $0xb0] sm:$0xff]
        %v335 = vld [vmem:[#allocation4 + $0xb8] sm:$0xff]
        %v336 = vld [vmem:[#allocation4 + $0xc0] sm:$0xff]
        %v337 = vld [vmem:[#allocation4 + $0xc8] sm:$0xff]
        %v338 = vld [vmem:[#allocation4 + $0xd0] sm:$0xff]
        %v339 = vld [vmem:[#allocation4 + $0xd8] sm:$0xff]
        %v340 = vld [vmem:[#allocation4 + $0xe0] sm:$0xff]
        %v341 = vld [vmem:[#allocation4 + $0xe8] sm:$0xff]
        %v342 = vld [vmem:[#allocation4 + $0xf0] sm:$0xff]
        %v343 = vld [vmem:[#allocation4 + $0xf8] sm:$0xff]
        %v344 = vld [vmem:[%s2] sm:$0x1]
        %v346 = vlaneseq
        %v347 = vshrl.u32 %v346, 7
        %v348 = vsub.s32 0, %v347
        %v349 = vrot.slane %v344, %v348
        %351 = vmatprep.subr.mxu0 0.0
        %352 = vmatpush1.msra.mxu0 %v312
        %353 = vmatprep.subr.mxu0 0.0
        %354 = vmatpush1.msra.mxu0 %v313
        %355 = vmatprep.subr.mxu0 0.0
        %356 = vmatpush1.msra.mxu0 %v314
        %357 = vmatprep.subr.mxu0 0.0
        %358 = vmatpush1.msra.mxu0 %v315
        %359 = vmatprep.subr.mxu0 0.0
        %360 = vmatpush1.msra.mxu0 %v316
        %361 = vmatprep.subr.mxu0 0.0
        %362 = vmatpush1.msra.mxu0 %v317
        %363 = vmatprep.subr.mxu0 0.0
        %364 = vmatpush1.msra.mxu0 %v318
        %365 = vmatprep.subr.mxu0 0.0
        %366 = vmatpush1.msra.mxu0 %v319
        %367 = vmatprep.subr.mxu0 0.0
        %368 = vmatpush1.msra.mxu0 %v320
        %369 = vmatprep.subr.mxu0 0.0
        %370 = vmatpush1.msra.mxu0 %v321
        %371 = vmatprep.subr.mxu0 0.0
        %372 = vmatpush1.msra.mxu0 %v322
        %373 = vmatprep.subr.mxu0 0.0
        %374 = vmatpush1.msra.mxu0 %v323
        %375 = vmatprep.subr.mxu0 0.0
        %376 = vmatpush1.msra.mxu0 %v324
        %377 = vmatprep.subr.mxu0 0.0
        %378 = vmatpush1.msra.mxu0 %v325
        %379 = vmatprep.subr.mxu0 0.0
        %380 = vmatpush1.msra.mxu0 %v326
        %381 = vmatprep.subr.mxu0 0.0
        %382 = vmatpush1.msra.mxu0 %v327
        %383 = vmatprep.subr.mxu0 0.0
        %384 = vmatpush1.msra.mxu0 %v328
        %385 = vmatprep.subr.mxu0 0.0
        %386 = vmatpush1.msra.mxu0 %v329
        %387 = vmatprep.subr.mxu0 0.0
        %388 = vmatpush1.msra.mxu0 %v330
        %389 = vmatprep.subr.mxu0 0.0
        %390 = vmatpush1.msra.mxu0 %v331
        %391 = vmatprep.subr.mxu0 0.0
        %392 = vmatpush1.msra.mxu0 %v332
        %393 = vmatprep.subr.mxu0 0.0
        %394 = vmatpush1.msra.mxu0 %v333
        %395 = vmatprep.subr.mxu0 0.0
        %396 = vmatpush1.msra.mxu0 %v334
        %397 = vmatprep.subr.mxu0 0.0
        %398 = vmatpush1.msra.mxu0 %v335
        %399 = vmatprep.subr.mxu0 0.0
        %400 = vmatpush1.msra.mxu0 %v336
        %401 = vmatprep.subr.mxu0 0.0
        %402 = vmatpush1.msra.mxu0 %v337
        %403 = vmatprep.subr.mxu0 0.0
        %404 = vmatpush1.msra.mxu0 %v338
        %405 = vmatprep.subr.mxu0 0.0
        %406 = vmatpush1.msra.mxu0 %v339
        %407 = vmatprep.subr.mxu0 0.0
        %408 = vmatpush1.msra.mxu0 %v340
        %409 = vmatprep.subr.mxu0 0.0
        %410 = vmatpush1.msra.mxu0 %v341
        %411 = vmatprep.subr.mxu0 0.0
        %412 = vmatpush1.msra.mxu0 %v342
        %413 = vmatprep.subr.mxu0 0.0
        %414 = vmatpush1.msra.mxu0 %v343
        %415 = vmatprep.mubr.f32.mxu0 %v311
        %416 = vmatmul.mubr.f32.gmra.mrb[0].mxu0 %v310
        %v417 = vpop.f32.mrb[0].mxu0
        %v418 = vadd.f32 %v349, %v417
        %v419 = vpop.f32.mrb[0].mxu0
        %420 = vdwg.mxu0
        %v421 = vtanh.pop %v418
        %v422 = vld [vmem:[%s3] sm:$0xff]
        %v423 = vld [vmem:[%s3 + $0x8] sm:$0xff]
        %v424 = vld [vmem:[%s3 + $0x10] sm:$0xff]
        %v425 = vld [vmem:[%s3 + $0x18] sm:$0xff]
        %v426 = vld [vmem:[%s3 + $0x20] sm:$0xff]
        %v427 = vld [vmem:[%s3 + $0x28] sm:$0xff]
        %v428 = vld [vmem:[%s3 + $0x30] sm:$0xff]
        %v429 = vld [vmem:[%s3 + $0x38] sm:$0xff]
        %v430 = vld [vmem:[%s3 + $0x40] sm:$0xff]
        %v431 = vld [vmem:[%s3 + $0x48] sm:$0xff]
        %v432 = vld [vmem:[%s3 + $0x50] sm:$0xff]
        %v433 = vld [vmem:[%s3 + $0x58] sm:$0xff]
        %v434 = vld [vmem:[%s3 + $0x60] sm:$0xff]
        %v435 = vld [vmem:[%s3 + $0x68] sm:$0xff]
        %v436 = vld [vmem:[%s3 + $0x70] sm:$0xff]
        %v437 = vld [vmem:[%s3 + $0x78] sm:$0xff]
        %v438 = vld [vmem:[%s4] sm:$0x1]
        %v440 = vlaneseq
        %v441 = vshrl.u32 %v440, 7
        %v442 = vsub.s32 0, %v441
        %v443 = vrot.slane %v438, %v442
        %445 = vmatprep.subr.mxu0 0.0
        %446 = vmatpush1.msra.mxu0 %v422
        %447 = vmatprep.subr.mxu0 0.0
        %448 = vmatpush1.msra.mxu0 %v423
        %449 = vmatprep.subr.mxu0 0.0
        %450 = vmatpush1.msra.mxu0 %v424
        %451 = vmatprep.subr.mxu0 0.0
        %452 = vmatpush1.msra.mxu0 %v425
        %453 = vmatprep.subr.mxu0 0.0
        %454 = vmatpush1.msra.mxu0 %v426
        %455 = vmatprep.subr.mxu0 0.0
        %456 = vmatpush1.msra.mxu0 %v427
        %457 = vmatprep.subr.mxu0 0.0
        %458 = vmatpush1.msra.mxu0 %v428
        %459 = vmatprep.subr.mxu0 0.0
        %460 = vmatpush1.msra.mxu0 %v429
        %461 = vmatprep.subr.mxu0 0.0
        %462 = vmatpush1.msra.mxu0 %v430
        %463 = vmatprep.subr.mxu0 0.0
        %464 = vmatpush1.msra.mxu0 %v431
        %465 = vmatprep.subr.mxu0 0.0
        %466 = vmatpush1.msra.mxu0 %v432
        %467 = vmatprep.subr.mxu0 0.0
        %468 = vmatpush1.msra.mxu0 %v433
        %469 = vmatprep.subr.mxu0 0.0
        %470 = vmatpush1.msra.mxu0 %v434
        %471 = vmatprep.subr.mxu0 0.0
        %472 = vmatpush1.msra.mxu0 %v435
        %473 = vmatprep.subr.mxu0 0.0
        %474 = vmatpush1.msra.mxu0 %v436
        %475 = vmatprep.subr.mxu0 0.0
        %476 = vmatpush1.msra.mxu0 %v437
        %477 = vmatprep.subr.mxu0 0.0
        %478 = vmatpush1.msra.mxu0 0.0
        %479 = vmatprep.subr.mxu0 0.0
        %480 = vmatpush1.msra.mxu0 0.0
        %481 = vmatprep.subr.mxu0 0.0
        %482 = vmatpush1.msra.mxu0 0.0
        %483 = vmatprep.subr.mxu0 0.0
        %484 = vmatpush1.msra.mxu0 0.0
        %485 = vmatprep.subr.mxu0 0.0
        %486 = vmatpush1.msra.mxu0 0.0
        %487 = vmatprep.subr.mxu0 0.0
        %488 = vmatpush1.msra.mxu0 0.0
        %489 = vmatprep.subr.mxu0 0.0
        %490 = vmatpush1.msra.mxu0 0.0
        %491 = vmatprep.subr.mxu0 0.0
        %492 = vmatpush1.msra.mxu0 0.0
        %493 = vmatprep.subr.mxu0 0.0
        %494 = vmatpush1.msra.mxu0 0.0
        %495 = vmatprep.subr.mxu0 0.0
        %496 = vmatpush1.msra.mxu0 0.0
        %497 = vmatprep.subr.mxu0 0.0
        %498 = vmatpush1.msra.mxu0 0.0
        %499 = vmatprep.subr.mxu0 0.0
        %500 = vmatpush1.msra.mxu0 0.0
        %501 = vmatprep.subr.mxu0 0.0
        %502 = vmatpush1.msra.mxu0 0.0
        %503 = vmatprep.subr.mxu0 0.0
        %504 = vmatpush1.msra.mxu0 0.0
        %505 = vmatprep.subr.mxu0 0.0
        %506 = vmatpush1.msra.mxu0 0.0
        %507 = vmatprep.subr.mxu0 0.0
        %508 = vmatpush1.msra.mxu0 0.0
        %509 = vmatprep.mubr.f32.mxu0 0.0
        %510 = vmatmul.mubr.f32.gmra.mrb[0].mxu0 %v421
        %v511 = vpop.f32.mrb[0].mxu0
        %v512 = vadd.f32 %v443, %v511
        %v513 = vpop.f32.mrb[0].mxu0
        %514 = vdwg.mxu0
        %v515 = vtanh.pop %v512
        %v516 = vld [vmem:[%s5] sm:$0xff]
        %v517 = vld [vmem:[%s5 + $0x8] sm:$0xff]
        %v518 = vld [vmem:[%s5 + $0x10] sm:$0xff]
        %v519 = vld [vmem:[%s5 + $0x18] sm:$0xff]
        %v520 = vld [vmem:[%s5 + $0x20] sm:$0xff]
        %v521 = vld [vmem:[%s5 + $0x28] sm:$0xff]
        %v522 = vld [vmem:[%s5 + $0x30] sm:$0xff]
        %v523 = vld [vmem:[%s5 + $0x38] sm:$0xff]
        %v524 = vld [vmem:[%s5 + $0x40] sm:$0xff]
        %v525 = vld [vmem:[%s5 + $0x48] sm:$0xff]
        %v526 = vld [vmem:[%s5 + $0x50] sm:$0xff]
        %v527 = vld [vmem:[%s5 + $0x58] sm:$0xff]
        %v528 = vld [vmem:[%s5 + $0x60] sm:$0xff]
        %v529 = vld [vmem:[%s5 + $0x68] sm:$0xff]
        %v530 = vld [vmem:[%s5 + $0x70] sm:$0xff]
        %v531 = vld [vmem:[%s5 + $0x78] sm:$0xff]
        %v532 = vld [vmem:[%s6] sm:$0x1]
        %v534 = vlaneseq
        %v535 = vshrl.u32 %v534, 7
        %v536 = vsub.s32 0, %v535
        %v537 = vrot.slane %v532, %v536
        %539 = vmatprep.subr.mxu0 0.0
        %540 = vmatpush1.msra.mxu0 %v516
        %541 = vmatprep.subr.mxu0 0.0
        %542 = vmatpush1.msra.mxu0 %v517
        %543 = vmatprep.subr.mxu0 0.0
        %544 = vmatpush1.msra.mxu0 %v518
        %545 = vmatprep.subr.mxu0 0.0
        %546 = vmatpush1.msra.mxu0 %v519
        %547 = vmatprep.subr.mxu0 0.0
        %548 = vmatpush1.msra.mxu0 %v520
        %549 = vmatprep.subr.mxu0 0.0
        %550 = vmatpush1.msra.mxu0 %v521
        %551 = vmatprep.subr.mxu0 0.0
        %552 = vmatpush1.msra.mxu0 %v522
        %553 = vmatprep.subr.mxu0 0.0
        %554 = vmatpush1.msra.mxu0 %v523
        %555 = vmatprep.subr.mxu0 0.0
        %556 = vmatpush1.msra.mxu0 %v524
        %557 = vmatprep.subr.mxu0 0.0
        %558 = vmatpush1.msra.mxu0 %v525
        %559 = vmatprep.subr.mxu0 0.0
        %560 = vmatpush1.msra.mxu0 %v526
        %561 = vmatprep.subr.mxu0 0.0
        %562 = vmatpush1.msra.mxu0 %v527
        %563 = vmatprep.subr.mxu0 0.0
        %564 = vmatpush1.msra.mxu0 %v528
        %565 = vmatprep.subr.mxu0 0.0
        %566 = vmatpush1.msra.mxu0 %v529
        %567 = vmatprep.subr.mxu0 0.0
        %568 = vmatpush1.msra.mxu0 %v530
        %569 = vmatprep.subr.mxu0 0.0
        %570 = vmatpush1.msra.mxu0 %v531
        %571 = vmatprep.subr.mxu0 0.0
        %572 = vmatpush1.msra.mxu0 0.0
        %573 = vmatprep.subr.mxu0 0.0
        %574 = vmatpush1.msra.mxu0 0.0
        %575 = vmatprep.subr.mxu0 0.0
        %576 = vmatpush1.msra.mxu0 0.0
        %577 = vmatprep.subr.mxu0 0.0
        %578 = vmatpush1.msra.mxu0 0.0
        %579 = vmatprep.subr.mxu0 0.0
        %580 = vmatpush1.msra.mxu0 0.0
        %581 = vmatprep.subr.mxu0 0.0
        %582 = vmatpush1.msra.mxu0 0.0
        %583 = vmatprep.subr.mxu0 0.0
        %584 = vmatpush1.msra.mxu0 0.0
        %585 = vmatprep.subr.mxu0 0.0
        %586 = vmatpush1.msra.mxu0 0.0
        %587 = vmatprep.subr.mxu0 0.0
        %588 = vmatpush1.msra.mxu0 0.0
        %589 = vmatprep.subr.mxu0 0.0
        %590 = vmatpush1.msra.mxu0 0.0
        %591 = vmatprep.subr.mxu0 0.0
        %592 = vmatpush1.msra.mxu0 0.0
        %593 = vmatprep.subr.mxu0 0.0
        %594 = vmatpush1.msra.mxu0 0.0
        %595 = vmatprep.subr.mxu0 0.0
        %596 = vmatpush1.msra.mxu0 0.0
        %597 = vmatprep.subr.mxu0 0.0
        %598 = vmatpush1.msra.mxu0 0.0
        %599 = vmatprep.subr.mxu0 0.0
        %600 = vmatpush1.msra.mxu0 0.0
        %601 = vmatprep.subr.mxu0 0.0
        %602 = vmatpush1.msra.mxu0 0.0
        %603 = vmatprep.mubr.f32.mxu0 0.0
        %604 = vmatmul.mubr.f32.gmra.mrb[0].mxu0 %v515
        %v605 = vpop.f32.mrb[0].mxu0
        %v606 = vadd.f32 %v537, %v605
        %v607 = vpop.f32.mrb[0].mxu0
        %608 = vdwg.mxu0
        %vm609 = vcmask 64512
        %610 = vst.msk [vmem:[%s309] sm:$0xff] %vm609, %v606
        %p611 = scmp.lt.s32.totalorder %s22, 1
        %s612 = scalar_select %p611, %s22, 1
        %s613 = smul.addr %s612, 8
        %s614 = scalar_lea.vmem %s7, %s613
        // Predicated region
        $region57: #{tpu_custom_call.1} parent=47 // pred_check
          %p615 = pneg %p192
        $region58: #{tpu_custom_call.1} parent=47 // pred_check_branch
          %617 = sbr.rel (%p615) target = $region60
        $region59: #{tpu_custom_call.1} parent=47 // pred_region
          _
        $region60: #{tpu_custom_call.1} parent=47 // pred_fallthru
          _
      $region48: #{tpu_custom_call.1} parent=5 // pred_fallthru
        _
      %p618 = scmp.le.s32.totalorder 2, %s17
      // Predicated region
      $region61: #{tpu_custom_call.1} parent=5 // pred_check
        %p619 = pneg %p618
      $region62: #{tpu_custom_call.1} parent=5 // pred_check_branch
        %621 = sbr.rel (%p619) target = $region64
      $region63: #{tpu_custom_call.1} parent=5 // pred_region
        %s622 = ssub.s32 %s17, 2
        // Predicated region
        $region65: #{tpu_custom_call.1} parent=63 // pred_check
          %p623 = pneg %p198
        $region66: #{tpu_custom_call.1} parent=63 // pred_check_branch
          %625 = sbr.rel (%p623) target = $region68
        $region67: #{tpu_custom_call.1} parent=63 // pred_region
          %p626 = scmp.lt.s32.totalorder %s23, 1
          %s627 = scalar_select %p626, %s23, 1
          %s628 = smul.addr %s627, 8
          %s629 = scalar_lea.vmem %s7, %s628
        $region68: #{tpu_custom_call.1} parent=63 // pred_fallthru
          _
      $region64: #{tpu_custom_call.1} parent=5 // pred_fallthru
        _
    $region6: #{tpu_custom_call.1} parent=1 // loop_footer
      %s21 = sadd.s32 1, %s17
    $region7: #{tpu_custom_call.1} parent=1 // loop_footer_branch
      %16 = sbr.rel target = $region3
    $region8: #{tpu_custom_call.1} parent=1 // loop_exit
      _
    %630 = vsyncpa [#allocation3], 1
    %s631 = scalar_lea.sflag [#allocation3], 1
    %632 = vsyncpa %s631, 1
    %633 = vsyncpa [#allocation5], 1

</llo_original>
